<compile_context>
chip_gen: v7x
topology: tpu7x:2x2x1
jax: 0.10.0
libtpu: 0.0.40
codegen_flags: <defaults>
</compile_context>

<pallas_src>
import functools

import jax
import jax.numpy as jnp
from jax import lax
from jax.experimental import pallas as pl
from jax.experimental.pallas import tpu as pltpu


# ------------------------------ Pallas kernel ------------------------------ #
def shufflenet_unit_kernel(x_ref, w1_ref, b1_ref, dwk_ref, dwb_ref,
                           w2_ref, b2_ref, o_ref, *, H, Cmid):
    """Fused ShuffleNetUnit forward on a lane-dense 2D layout.

    x_ref  : (N*H, W*Cin)    one sublane row per image row, lanes = (w, cin)
    w1_ref : (W*Cin, W*Cmid) spatially block-diag gp1 weight (BN + shuffle folded)
    b1_ref : (1, W*Cmid)
    dwk_ref: (9, W*Cmid)     depthwise taps, row = dh*3+dw, tiled per pixel
    dwb_ref: (1, W*Cmid)
    w2_ref : (W*Cmid, W*Cout) spatially block-diag expand weight (BN folded)
    b2_ref : (1, W*Cout)
    o_ref  : (N*H, W*Cout)
    """
    NH = x_ref.shape[0]
    WCmid = w1_ref.shape[1]

    x_ld = x_ref[...]                                          # (NH, W*Cin)

    # --- gp1: grouped 1x1 conv + BN + ReLU (channel shuffle folded into cols).
    mid = jnp.dot(x_ld, w1_ref[...], preferred_element_type=jnp.float32)
    mid = jnp.maximum(mid + b1_ref[...], 0.0)                  # (NH, W*Cmid)

    # --- depthwise 3x3, stride 1, pad 1 (+ BN), on the lane-dense layout.
    # Row (h) shifts: zero-padded sublane shifts + iota mask (no cross-image
    # leakage).  Column (w) shifts: one lane-pad concat + 3 static lane slices.
    h_ids = lax.broadcasted_iota(jnp.int32, (NH, WCmid), 0) % H
    not_top = h_ids != 0            # valid when reading the row above (h-1)
    not_bot = h_ids != (H - 1)      # valid when reading the row below (h+1)

    zrow = jnp.zeros((1, WCmid), jnp.float32)
    zcol = jnp.zeros((NH, Cmid), jnp.float32)
    taps = dwk_ref[...]                                        # (9, W*Cmid)

    acc = jnp.zeros((NH, WCmid), jnp.float32)
    for dh in range(3):
        sh = dh - 1
        if sh == -1:     # rows[r] = mid[r-1]
            rows = jnp.concatenate([zrow, mid[:-1, :]], axis=0)
            rows = jnp.where(not_top, rows, 0.0)
        elif sh == 1:    # rows[r] = mid[r+1]
            rows = jnp.concatenate([mid[1:, :], zrow], axis=0)
            rows = jnp.where(not_bot, rows, 0.0)
        else:
            rows = mid
        # zero-pad one pixel (Cmid lanes) on each side along w.
        padded = jnp.concatenate([zcol, rows, zcol], axis=1)   # (NH, (W+2)*Cmid)
        for dw in range(3):
            window = padded[:, dw * Cmid: dw * Cmid + WCmid]   # mid[h+dh-1, w+dw-1]
            acc = acc + window * taps[dh * 3 + dw: dh * 3 + dw + 1, :]
    acc = acc + dwb_ref[...]                                   # (NH, W*Cmid)

    # --- expand: grouped 1x1 conv + BN, then identity shortcut + ReLU.
    exp_ld = jnp.dot(acc, w2_ref[...], preferred_element_type=jnp.float32)
    exp_ld = exp_ld + b2_ref[...]                              # (NH, W*Cout)
    o_ref[...] = jnp.maximum(exp_ld + x_ld, 0.0)


def shufflenet_unit_pallas(x_ld, w1_big, b1_big, dwk, dwb, w2_big, b2_big,
                           *, H, W, Cmid, Cout):
    NH = x_ld.shape[0]
    return pl.pallas_call(
        functools.partial(shufflenet_unit_kernel, H=H, Cmid=Cmid),
        out_shape=jax.ShapeDtypeStruct((NH, W * Cout), jnp.float32),
        # Single invocation (no grid): whole operands resident in VMEM.
        in_specs=[pl.BlockSpec(memory_space=pltpu.MemorySpace.VMEM)] * 7,
        out_specs=pl.BlockSpec(memory_space=pltpu.MemorySpace.VMEM),
    )(x_ld, w1_big, b1_big, dwk, dwb, w2_big, b2_big)


# ----------------------------- parameter glue ------------------------------ #
def grouped_pw_to_dense(w, groups):
    """(Cout, Cin_per_group, 1, 1) grouped 1x1 conv weight -> dense (Cin, Cout)
    block-diagonal matrix (exact equivalent of the grouped conv)."""
    Cout, Cin_g = w.shape[0], w.shape[1]
    Cout_g = Cout // groups
    Cin = Cin_g * groups
    w2 = w[:, :, 0, 0]                               # (Cout, Cin_g)
    dense = jnp.zeros((Cin, Cout), jnp.float32)
    for g in range(groups):
        blk = w2[g * Cout_g:(g + 1) * Cout_g, :].T   # (Cin_g, Cout_g)
        dense = dense.at[g * Cin_g:(g + 1) * Cin_g,
                         g * Cout_g:(g + 1) * Cout_g].set(blk)
    return dense


def fold_bn(w_dense, b, gamma, beta, mean, var, eps=1e-5):
    scale = gamma / jnp.sqrt(var + eps)
    return w_dense * scale[None, :], (b - mean) * scale + beta


def fold_params(p, groups, W, eps=1e-5):
    """Fold BN + channel shuffle, then build spatially block-diagonal /
    lane-tiled operands for the lane-dense kernel layout."""
    Cmid = p['w_gp1'].shape[0]
    Cout = p['w_exp'].shape[0]
    cpg = Cmid // groups

    # gp1 -> dense + BN fold + channel-shuffle permutation folded into columns.
    w1 = grouped_pw_to_dense(p['w_gp1'], groups)               # (Cin, Cmid)
    w1, b1 = fold_bn(w1, p['b_gp1'], p['g1'], p['be1'], p['m1'], p['v1'], eps)
    perm = jnp.array([g * cpg + c for c in range(cpg) for g in range(groups)])
    w1 = w1[:, perm]
    b1 = b1[perm]

    # depthwise taps (9, Cmid) with BN folded.
    s2 = p['g2'] / jnp.sqrt(p['v2'] + eps)
    dwk = (p['w_dw'][:, 0, :, :] * s2[:, None, None]).transpose(1, 2, 0)
    dwk = dwk.reshape(9, Cmid)
    dwb = (p['b_dw'] - p['m2']) * s2 + p['be2']

    # expand -> dense + BN fold.
    w2 = grouped_pw_to_dense(p['w_exp'], groups)               # (Cmid, Cout)
    w2, b2 = fold_bn(w2, p['b_exp'], p['g3'], p['be3'], p['m3'], p['v3'], eps)

    # Spatial block-diagonal weights (one block per pixel column) and lane-tiled
    # biases / taps for the (rows=N*H, lanes=W*C) layout.
    eye = jnp.eye(W, dtype=jnp.float32)
    w1_big = jnp.kron(eye, w1)                                 # (W*Cin, W*Cmid)
    w2_big = jnp.kron(eye, w2)                                 # (W*Cmid, W*Cout)
    b1_big = jnp.tile(b1.reshape(1, Cmid), (1, W))             # (1, W*Cmid)
    b2_big = jnp.tile(b2.reshape(1, Cout), (1, W))             # (1, W*Cout)
    dwk_big = jnp.tile(dwk, (1, W))                            # (9, W*Cmid)
    dwb_big = jnp.tile(dwb.reshape(1, Cmid), (1, W))           # (1, W*Cmid)
    return w1_big, b1_big, dwk_big, dwb_big, w2_big, b2_big


# --------------------------- pure-JAX reference ----------------------------- #
def ref_forward(x, p, groups):
    def conv(x, w, b, fg, padding):
        y = lax.conv_general_dilated(
            x, w, window_strides=(1, 1), padding=padding,
            dimension_numbers=('NCHW', 'OIHW', 'NCHW'), feature_group_count=fg)
        return y + b[None, :, None, None]

    def bn(x, g, bta, m, v, eps=1e-5):
        s = (g / jnp.sqrt(v + eps))[None, :, None, None]
        return (x - m[None, :, None, None]) * s + bta[None, :, None, None]

    s = conv(x, p['w_gp1'], p['b_gp1'], groups, 'VALID')
    s = jnp.maximum(bn(s, p['g1'], p['be1'], p['m1'], p['v1']), 0.0)
    B, C, H, W = s.shape
    s = s.reshape(B, groups, C // groups, H, W).transpose(0, 2, 1, 3, 4)
    s = s.reshape(B, C, H, W)                                  # channel shuffle
    s = conv(s, p['w_dw'], p['b_dw'], C, [(1, 1), (1, 1)])     # depthwise
    s = bn(s, p['g2'], p['be2'], p['m2'], p['v2'])
    s = conv(s, p['w_exp'], p['b_exp'], groups, 'VALID')       # expand
    s = bn(s, p['g3'], p['be3'], p['m3'], p['v3'])
    return jnp.maximum(x + s, 0.0)                             # add + ReLU


# --------------------------------- main ------------------------------------ #
if __name__ == "__main__":
    N, Cin, H, W = 2, 32, 16, 16
    Cout, groups = 32, 4
    Cmid = Cout // 4                        # = 8

    key = jax.random.PRNGKey(0)
    ks = jax.random.split(key, 20)
    nrm = lambda k, s: 0.1 * jax.random.normal(k, s, jnp.float32)

    p = dict(
        # gp1: grouped 1x1 conv Cin -> Cmid
        w_gp1=nrm(ks[0], (Cmid, Cin // groups, 1, 1)), b_gp1=nrm(ks[1], (Cmid,)),
        g1=1.0 + nrm(ks[2], (Cmid,)), be1=nrm(ks[3], (Cmid,)),
        m1=nrm(ks[4], (Cmid,)), v1=0.5 + jnp.abs(nrm(ks[5], (Cmid,))),
        # depthwise 3x3 conv (groups = Cmid)
        w_dw=nrm(ks[6], (Cmid, 1, 3, 3)), b_dw=nrm(ks[7], (Cmid,)),
        g2=1.0 + nrm(ks[8], (Cmid,)), be2=nrm(ks[9], (Cmid,)),
        m2=nrm(ks[10], (Cmid,)), v2=0.5 + jnp.abs(nrm(ks[11], (Cmid,))),
        # expand: grouped 1x1 conv Cmid -> Cout
        w_exp=nrm(ks[12], (Cout, Cmid // groups, 1, 1)), b_exp=nrm(ks[13], (Cout,)),
        g3=1.0 + nrm(ks[14], (Cout,)), be3=nrm(ks[15], (Cout,)),
        m3=nrm(ks[16], (Cout,)), v3=0.5 + jnp.abs(nrm(ks[17], (Cout,))),
    )

    # ---- fold parameters for the lane-dense kernel.
    w1_big, b1_big, dwk, dwb, w2_big, b2_big = fold_params(p, groups, W)

    # ---- input (NCHW, PyTorch convention) -> lane-dense (N*H, W*Cin).
    x_nchw = jax.random.normal(ks[18], (N, Cin, H, W), jnp.float32)
    x_ld = jnp.transpose(x_nchw, (0, 2, 3, 1)).reshape(N * H, W * Cin)

    out_ld = shufflenet_unit_pallas(x_ld, w1_big, b1_big, dwk, dwb, w2_big,
                                    b2_big, H=H, W=W, Cmid=Cmid, Cout=Cout)
    out_ld = jax.block_until_ready(out_ld)
    out_nchw = jnp.transpose(out_ld.reshape(N, H, W, Cout), (0, 3, 1, 2))

    ref = ref_forward(x_nchw, p, groups)
    assert out_nchw.shape == (N, Cout, H, W)
    err = float(jnp.max(jnp.abs(out_nchw - ref)))
    assert jnp.allclose(out_nchw, ref, atol=1e-4, rtol=1e-4), err

    print("KERNEL_OK")
</pallas_src>

<mosaic_0001>
module attributes {stable_mosaic.version = 11 : i64} {
  func.func @shufflenet_unit_kernel(%arg0: memref<32x512xf32, #tpu.memory_space<vmem>>, %arg1: memref<512x128xf32, #tpu.memory_space<vmem>>, %arg2: memref<1x128xf32, #tpu.memory_space<vmem>>, %arg3: memref<9x128xf32, #tpu.memory_space<vmem>>, %arg4: memref<1x128xf32, #tpu.memory_space<vmem>>, %arg5: memref<128x512xf32, #tpu.memory_space<vmem>>, %arg6: memref<1x512xf32, #tpu.memory_space<vmem>>, %arg7: memref<32x512xf32, #tpu.memory_space<vmem>>) attributes {dimension_semantics = [], scalar_prefetch = 0 : i64, scratch_operands = 0 : i64, tpu.core_type = #tpu.core_type<tc>} {
    %c0 = arith.constant 0 : index
    %c0_0 = arith.constant 0 : index
    %0 = vector.load %arg0[%c0, %c0_0] : memref<32x512xf32, #tpu.memory_space<vmem>>, vector<32x512xf32>
    %c0_1 = arith.constant 0 : index
    %c0_2 = arith.constant 0 : index
    %1 = vector.load %arg1[%c0_1, %c0_2] : memref<512x128xf32, #tpu.memory_space<vmem>>, vector<512x128xf32>
    %cst = arith.constant dense<0.000000e+00> : vector<32x128xf32>
    %2 = tpu.matmul %0, %1, %cst {dimension_numbers = #tpu.dot_dimension_numbers<[1], [0], [0], [1], [0, 0, 1, 1], [], []>} : vector<32x512xf32>, vector<512x128xf32>, vector<32x128xf32> -> vector<32x128xf32>
    %c0_3 = arith.constant 0 : index
    %c0_4 = arith.constant 0 : index
    %3 = vector.load %arg2[%c0_3, %c0_4] : memref<1x128xf32, #tpu.memory_space<vmem>>, vector<1x128xf32>
    %4 = vector.broadcast %3 : vector<1x128xf32> to vector<32x128xf32>
    %5 = arith.addf %2, %4 : vector<32x128xf32>
    %cst_5 = arith.constant 0.000000e+00 : f32
    %6 = vector.broadcast %cst_5 : f32 to vector<32x128xf32>
    %7 = arith.maximumf %5, %6 : vector<32x128xf32>
    %8 = tpu.iota {dimensions = array<i32: 0>} : vector<32x128xi32>
    %c16_i32 = arith.constant 16 : i32
    %c0_i32 = arith.constant 0 : i32
    %9 = arith.cmpi eq, %c16_i32, %c0_i32 : i32
    %c1_i32 = arith.constant 1 : i32
    %10 = arith.select %9, %c1_i32, %c16_i32 : i32
    %11 = vector.broadcast %10 : i32 to vector<32x128xi32>
    %12 = arith.remsi %8, %11 : vector<32x128xi32>
    %c0_i32_6 = arith.constant 0 : i32
    %13 = vector.broadcast %c0_i32_6 : i32 to vector<32x128xi32>
    %14 = arith.cmpi ne, %12, %13 : vector<32x128xi32>
    %c0_i32_7 = arith.constant 0 : i32
    %15 = vector.broadcast %c0_i32_7 : i32 to vector<32x128xi32>
    %16 = arith.cmpi slt, %12, %15 : vector<32x128xi32>
    %c0_i32_8 = arith.constant 0 : i32
    %17 = arith.cmpi slt, %10, %c0_i32_8 : i32
    %18 = vector.broadcast %17 : i1 to vector<32x128xi1>
    %19 = vector.broadcast %18 : vector<32x128xi1> to vector<32x128xi1>
    %20 = arith.xori %16, %19 : vector<32x128xi1>
    %21 = arith.andi %20, %14 : vector<32x128xi1>
    %22 = vector.broadcast %10 : i32 to vector<32x128xi32>
    %23 = arith.addi %12, %22 : vector<32x128xi32>
    %24 = arith.select %21, %23, %12 : vector<32x128xi1>, vector<32x128xi32>
    %c0_i32_9 = arith.constant 0 : i32
    %25 = vector.broadcast %c0_i32_9 : i32 to vector<32x128xi32>
    %26 = arith.cmpi ne, %24, %25 : vector<32x128xi32>
    %c15_i32 = arith.constant 15 : i32
    %27 = vector.broadcast %c15_i32 : i32 to vector<32x128xi32>
    %28 = arith.cmpi ne, %24, %27 : vector<32x128xi32>
    %cst_10 = arith.constant 0.000000e+00 : f32
    %29 = vector.broadcast %cst_10 : f32 to vector<1x128xf32>
    %cst_11 = arith.constant 0.000000e+00 : f32
    %30 = vector.broadcast %cst_11 : f32 to vector<32x8xf32>
    %c0_12 = arith.constant 0 : index
    %c0_13 = arith.constant 0 : index
    %31 = vector.load %arg3[%c0_12, %c0_13] : memref<9x128xf32, #tpu.memory_space<vmem>>, vector<9x128xf32>
    %cst_14 = arith.constant 0.000000e+00 : f32
    %32 = vector.broadcast %cst_14 : f32 to vector<32x128xf32>
    %33 = vector.extract_strided_slice %7 {offsets = [0, 0], sizes = [31, 128], strides = [1, 1]} : vector<32x128xf32> to vector<31x128xf32>
    %34 = tpu.concatenate %29, %33 in 0 : vector<1x128xf32>, vector<31x128xf32> -> vector<32x128xf32>
    %cst_15 = arith.constant 0.000000e+00 : f32
    %35 = vector.broadcast %cst_15 : f32 to vector<32x128xf32>
    %36 = arith.select %26, %34, %35 : vector<32x128xi1>, vector<32x128xf32>
    %37 = tpu.concatenate %30, %36, %30 in 1 : vector<32x8xf32>, vector<32x128xf32>, vector<32x8xf32> -> vector<32x144xf32>
    %38 = vector.extract_strided_slice %37 {offsets = [0, 0], sizes = [32, 128], strides = [1, 1]} : vector<32x144xf32> to vector<32x128xf32>
    %39 = vector.extract_strided_slice %31 {offsets = [0, 0], sizes = [1, 128], strides = [1, 1]} : vector<9x128xf32> to vector<1x128xf32>
    %40 = vector.broadcast %39 : vector<1x128xf32> to vector<32x128xf32>
    %41 = arith.mulf %38, %40 : vector<32x128xf32>
    %42 = arith.addf %32, %41 : vector<32x128xf32>
    %43 = vector.extract_strided_slice %37 {offsets = [0, 8], sizes = [32, 128], strides = [1, 1]} : vector<32x144xf32> to vector<32x128xf32>
    %44 = vector.extract_strided_slice %31 {offsets = [1, 0], sizes = [1, 128], strides = [1, 1]} : vector<9x128xf32> to vector<1x128xf32>
    %45 = vector.broadcast %44 : vector<1x128xf32> to vector<32x128xf32>
    %46 = arith.mulf %43, %45 : vector<32x128xf32>
    %47 = arith.addf %42, %46 : vector<32x128xf32>
    %48 = vector.extract_strided_slice %37 {offsets = [0, 16], sizes = [32, 128], strides = [1, 1]} : vector<32x144xf32> to vector<32x128xf32>
    %49 = vector.extract_strided_slice %31 {offsets = [2, 0], sizes = [1, 128], strides = [1, 1]} : vector<9x128xf32> to vector<1x128xf32>
    %50 = vector.broadcast %49 : vector<1x128xf32> to vector<32x128xf32>
    %51 = arith.mulf %48, %50 : vector<32x128xf32>
    %52 = arith.addf %47, %51 : vector<32x128xf32>
    %53 = tpu.concatenate %30, %7, %30 in 1 : vector<32x8xf32>, vector<32x128xf32>, vector<32x8xf32> -> vector<32x144xf32>
    %54 = vector.extract_strided_slice %53 {offsets = [0, 0], sizes = [32, 128], strides = [1, 1]} : vector<32x144xf32> to vector<32x128xf32>
    %55 = vector.extract_strided_slice %31 {offsets = [3, 0], sizes = [1, 128], strides = [1, 1]} : vector<9x128xf32> to vector<1x128xf32>
    %56 = vector.broadcast %55 : vector<1x128xf32> to vector<32x128xf32>
    %57 = arith.mulf %54, %56 : vector<32x128xf32>
    %58 = arith.addf %52, %57 : vector<32x128xf32>
    %59 = vector.extract_strided_slice %53 {offsets = [0, 8], sizes = [32, 128], strides = [1, 1]} : vector<32x144xf32> to vector<32x128xf32>
    %60 = vector.extract_strided_slice %31 {offsets = [4, 0], sizes = [1, 128], strides = [1, 1]} : vector<9x128xf32> to vector<1x128xf32>
    %61 = vector.broadcast %60 : vector<1x128xf32> to vector<32x128xf32>
    %62 = arith.mulf %59, %61 : vector<32x128xf32>
    %63 = arith.addf %58, %62 : vector<32x128xf32>
    %64 = vector.extract_strided_slice %53 {offsets = [0, 16], sizes = [32, 128], strides = [1, 1]} : vector<32x144xf32> to vector<32x128xf32>
    %65 = vector.extract_strided_slice %31 {offsets = [5, 0], sizes = [1, 128], strides = [1, 1]} : vector<9x128xf32> to vector<1x128xf32>
    %66 = vector.broadcast %65 : vector<1x128xf32> to vector<32x128xf32>
    %67 = arith.mulf %64, %66 : vector<32x128xf32>
    %68 = arith.addf %63, %67 : vector<32x128xf32>
    %69 = vector.extract_strided_slice %7 {offsets = [1, 0], sizes = [31, 128], strides = [1, 1]} : vector<32x128xf32> to vector<31x128xf32>
    %70 = tpu.concatenate %69, %29 in 0 : vector<31x128xf32>, vector<1x128xf32> -> vector<32x128xf32>
    %cst_16 = arith.constant 0.000000e+00 : f32
    %71 = vector.broadcast %cst_16 : f32 to vector<32x128xf32>
    %72 = arith.select %28, %70, %71 : vector<32x128xi1>, vector<32x128xf32>
    %73 = tpu.concatenate %30, %72, %30 in 1 : vector<32x8xf32>, vector<32x128xf32>, vector<32x8xf32> -> vector<32x144xf32>
    %74 = vector.extract_strided_slice %73 {offsets = [0, 0], sizes = [32, 128], strides = [1, 1]} : vector<32x144xf32> to vector<32x128xf32>
    %75 = vector.extract_strided_slice %31 {offsets = [6, 0], sizes = [1, 128], strides = [1, 1]} : vector<9x128xf32> to vector<1x128xf32>
    %76 = vector.broadcast %75 : vector<1x128xf32> to vector<32x128xf32>
    %77 = arith.mulf %74, %76 : vector<32x128xf32>
    %78 = arith.addf %68, %77 : vector<32x128xf32>
    %79 = vector.extract_strided_slice %73 {offsets = [0, 8], sizes = [32, 128], strides = [1, 1]} : vector<32x144xf32> to vector<32x128xf32>
    %80 = vector.extract_strided_slice %31 {offsets = [7, 0], sizes = [1, 128], strides = [1, 1]} : vector<9x128xf32> to vector<1x128xf32>
    %81 = vector.broadcast %80 : vector<1x128xf32> to vector<32x128xf32>
    %82 = arith.mulf %79, %81 : vector<32x128xf32>
    %83 = arith.addf %78, %82 : vector<32x128xf32>
    %84 = vector.extract_strided_slice %73 {offsets = [0, 16], sizes = [32, 128], strides = [1, 1]} : vector<32x144xf32> to vector<32x128xf32>
    %85 = vector.extract_strided_slice %31 {offsets = [8, 0], sizes = [1, 128], strides = [1, 1]} : vector<9x128xf32> to vector<1x128xf32>
    %86 = vector.broadcast %85 : vector<1x128xf32> to vector<32x128xf32>
    %87 = arith.mulf %84, %86 : vector<32x128xf32>
    %88 = arith.addf %83, %87 : vector<32x128xf32>
    %c0_17 = arith.constant 0 : index
    %c0_18 = arith.constant 0 : index
    %89 = vector.load %arg4[%c0_17, %c0_18] : memref<1x128xf32, #tpu.memory_space<vmem>>, vector<1x128xf32>
    %90 = vector.broadcast %89 : vector<1x128xf32> to vector<32x128xf32>
    %91 = arith.addf %88, %90 : vector<32x128xf32>
    %c0_19 = arith.constant 0 : index
    %c0_20 = arith.constant 0 : index
    %92 = vector.load %arg5[%c0_19, %c0_20] : memref<128x512xf32, #tpu.memory_space<vmem>>, vector<128x512xf32>
    %cst_21 = arith.constant dense<0.000000e+00> : vector<32x512xf32>
    %93 = tpu.matmul %91, %92, %cst_21 {dimension_numbers = #tpu.dot_dimension_numbers<[1], [0], [0], [1], [0, 0, 1, 1], [], []>} : vector<32x128xf32>, vector<128x512xf32>, vector<32x512xf32> -> vector<32x512xf32>
    %c0_22 = arith.constant 0 : index
    %c0_23 = arith.constant 0 : index
    %94 = vector.load %arg6[%c0_22, %c0_23] : memref<1x512xf32, #tpu.memory_space<vmem>>, vector<1x512xf32>
    %95 = vector.broadcast %94 : vector<1x512xf32> to vector<32x512xf32>
    %96 = arith.addf %93, %95 : vector<32x512xf32>
    %97 = arith.addf %96, %0 : vector<32x512xf32>
    %cst_24 = arith.constant 0.000000e+00 : f32
    %98 = vector.broadcast %cst_24 : f32 to vector<32x512xf32>
    %99 = arith.maximumf %97, %98 : vector<32x512xf32>
    %c0_25 = arith.constant 0 : index
    %c0_26 = arith.constant 0 : index
    %100 = vector.load %arg7[%c0_25, %c0_26] : memref<32x512xf32, #tpu.memory_space<vmem>>, vector<32x512xf32>
    tpu.vector_store %arg7[%c0_25, %c0_26], %99 {strides = array<i32>} : memref<32x512xf32, #tpu.memory_space<vmem>>, vector<32x512xf32>,
    return
  }
}

</mosaic_0001>

<llo_original>
// kernel: tpu_custom_call.1
$region0: #{tpu_custom_call.1}
  #allocation0 [shape = 'u32[]', space=smem, size = 0x4, offset = 0x4, fixed_abs, tag = 'smem constant byte address 0x4 - core index']
  #allocation1 [shape = 'u32[144,128]{1,0:T(1,128)}', space=vmem, size = 0x12000, scoped, tag = 'internal scratch']
  %s0 = inlined_call_operand.hbm [shape: f32[32,512], index: 0, kind: input, shape index: {}]
  %s1 = inlined_call_operand.hbm [shape: f32[512,128], index: 1, kind: input, shape index: {}]
  %s2 = inlined_call_operand.vmem [shape: f32[1,128], index: 2, kind: input, shape index: {}]
  %s3 = inlined_call_operand.hbm [shape: f32[9,128], index: 3, kind: input, shape index: {}]
  %s4 = inlined_call_operand.vmem [shape: f32[1,128], index: 4, kind: input, shape index: {}]
  %s5 = inlined_call_operand.hbm [shape: f32[128,512], index: 5, kind: input, shape index: {}]
  %s6 = inlined_call_operand.vmem [shape: f32[1,512], index: 6, kind: input, shape index: {}]
  %s7 = inlined_call_operand.hbm [shape: f32[32,512], index: 7, kind: output, shape index: {}]
  %s8 = sld [smem:[#allocation0]]
  $region54: #{tpu_custom_call.1} parent=0
    _
  %s10 = ssub.s32 1, %s8
  %s11 = scalar_select 0, %s10, %s8
  $region1: #{tpu_custom_call.1} parent=0
    #allocation2 [shape = 'u8[65536]{0}', space=vmem, size = 0x10000, scoped, tag = 'input window, operand 0, single buffered']
    #allocation3 [shape = 's32[1]{0}', space=sflag, size = 0x4, scoped, tag = 'scoped memory for tpu_custom_call.1']
    #allocation4 [shape = 's32[1]{0}', space=sflag, size = 0x4, scoped, tag = 'scoped memory for tpu_custom_call.1']
    #allocation5 [shape = 'u8[262144]{0}', space=vmem, size = 0x40000, scoped, tag = 'input window, operand 1, single buffered']
    #allocation6 [shape = 's32[1]{0}', space=sflag, size = 0x4, scoped, tag = 'scoped memory for tpu_custom_call.1']
    #allocation7 [shape = 'u8[8192]{0}', space=vmem, size = 0x2000, scoped, tag = 'input window, operand 3, single buffered']
    #allocation8 [shape = 'u8[262144]{0}', space=vmem, size = 0x40000, scoped, tag = 'input window, operand 5, single buffered']
    #allocation9 [shape = 's32[1]{0}', space=sflag, size = 0x4, scoped, tag = 'scoped memory for tpu_custom_call.1']
    #allocation10 [shape = 'u8[65536]{0}', space=vmem, size = 0x10000, scoped, tag = 'output window, operand 0, single buffered']
    %12 = vsyncpa [#allocation3], 0
    %13 = vsyncpa [#allocation6], 0
    %14 = vsyncpa [#allocation9], 0
    %15 = vsyncpa [#allocation4], 0
    // Predicated region
    $region2: #{tpu_custom_call.1} parent=1 // pred_check
      _
    $region3: #{tpu_custom_call.1} parent=1 // pred_check_branch
      %17 = sbr.rel (0) target = $region5
    $region4: #{tpu_custom_call.1} parent=1 // pred_region
      %s19 = ssub.s32 2048, 2048
      %20 = vsyncadd [#allocation3], %s19
      %s21 = sshll.u32 [#allocation2], 4
      %s22 = int_to_ptr.vmem [resolvable:$true] %s21
      %27 = dma.hbm_to_vmem [thread:$0]  %s0, 2048, %s22, [#allocation3], 512, 512, 32
    $region5: #{tpu_custom_call.1} parent=1 // pred_fallthru
      _
    // Predicated region
    $region6: #{tpu_custom_call.1} parent=1 // pred_check
      _
    $region7: #{tpu_custom_call.1} parent=1 // pred_check_branch
      %29 = sbr.rel (0) target = $region9
    $region8: #{tpu_custom_call.1} parent=1 // pred_region
      %s31 = ssub.s32 8192, 8192
      %32 = vsyncadd [#allocation6], %s31
      %s33 = sshll.u32 [#allocation5], 4
      %s34 = int_to_ptr.vmem [resolvable:$true] %s33
      %39 = dma.hbm_to_vmem [thread:$0]  %s1, 8192, %s34, [#allocation6], 128, 128, 8
    $region9: #{tpu_custom_call.1} parent=1 // pred_fallthru
      _
    // Predicated region
    $region10: #{tpu_custom_call.1} parent=1 // pred_check
      _
    $region11: #{tpu_custom_call.1} parent=1 // pred_check_branch
      %41 = sbr.rel (0) target = $region13
    $region12: #{tpu_custom_call.1} parent=1 // pred_region
      _
    $region13: #{tpu_custom_call.1} parent=1 // pred_fallthru
      _
    // Predicated region
    $region14: #{tpu_custom_call.1} parent=1 // pred_check
      _
    $region15: #{tpu_custom_call.1} parent=1 // pred_check_branch
      %43 = sbr.rel (0) target = $region17
    $region16: #{tpu_custom_call.1} parent=1 // pred_region
      %s45 = ssub.s32 256, 256
      %46 = vsyncadd [#allocation6], %s45
      %s47 = sshll.u32 [#allocation7], 4
      %s48 = int_to_ptr.vmem [resolvable:$true] %s47
      %53 = dma.hbm_to_vmem [thread:$0]  %s3, 256, %s48, [#allocation6], 128, 128, 8
    $region17: #{tpu_custom_call.1} parent=1 // pred_fallthru
      _
    // Predicated region
    $region18: #{tpu_custom_call.1} parent=1 // pred_check
      _
    $region19: #{tpu_custom_call.1} parent=1 // pred_check_branch
      %55 = sbr.rel (0) target = $region21
    $region20: #{tpu_custom_call.1} parent=1 // pred_region
      _
    $region21: #{tpu_custom_call.1} parent=1 // pred_fallthru
      _
    // Predicated region
    $region22: #{tpu_custom_call.1} parent=1 // pred_check
      _
    $region23: #{tpu_custom_call.1} parent=1 // pred_check_branch
      %57 = sbr.rel (0) target = $region25
    $region24: #{tpu_custom_call.1} parent=1 // pred_region
      %s59 = ssub.s32 8192, 8192
      %60 = vsyncadd [#allocation9], %s59
      %s61 = sshll.u32 [#allocation8], 4
      %s62 = int_to_ptr.vmem [resolvable:$true] %s61
      %67 = dma.hbm_to_vmem [thread:$0]  %s5, 8192, %s62, [#allocation9], 512, 512, 32
    $region25: #{tpu_custom_call.1} parent=1 // pred_fallthru
      _
    // Predicated region
    $region26: #{tpu_custom_call.1} parent=1 // pred_check
      _
    $region27: #{tpu_custom_call.1} parent=1 // pred_check_branch
      %69 = sbr.rel (0) target = $region29
    $region28: #{tpu_custom_call.1} parent=1 // pred_region
      _
    $region29: #{tpu_custom_call.1} parent=1 // pred_fallthru
      _
    // Predicated region
    $region30: #{tpu_custom_call.1} parent=1 // pred_check
      _
    $region31: #{tpu_custom_call.1} parent=1 // pred_check_branch
      %71 = sbr.rel (0) target = $region33
    $region32: #{tpu_custom_call.1} parent=1 // pred_region
      %72 = dma.done [#allocation3], 2048
    $region33: #{tpu_custom_call.1} parent=1 // pred_fallthru
      _
    // Predicated region
    $region34: #{tpu_custom_call.1} parent=1 // pred_check
      _
    $region35: #{tpu_custom_call.1} parent=1 // pred_check_branch
      %74 = sbr.rel (0) target = $region37
    $region36: #{tpu_custom_call.1} parent=1 // pred_region
      %75 = dma.done [#allocation6], 8192
    $region37: #{tpu_custom_call.1} parent=1 // pred_fallthru
      _
    // Predicated region
    $region38: #{tpu_custom_call.1} parent=1 // pred_check
      _
    $region39: #{tpu_custom_call.1} parent=1 // pred_check_branch
      %77 = sbr.rel (0) target = $region41
    $region40: #{tpu_custom_call.1} parent=1 // pred_region
      %78 = dma.done [#allocation6], 256
    $region41: #{tpu_custom_call.1} parent=1 // pred_fallthru
      _
    // Predicated region
    $region42: #{tpu_custom_call.1} parent=1 // pred_check
      _
    $region43: #{tpu_custom_call.1} parent=1 // pred_check_branch
      %80 = sbr.rel (0) target = $region45
    $region44: #{tpu_custom_call.1} parent=1 // pred_region
      %81 = dma.done [#allocation9], 8192
    $region45: #{tpu_custom_call.1} parent=1 // pred_fallthru
      _
    %v82 = vld [vmem:[#allocation2] sm:$0xff]
    %v83 = vld [vmem:[#allocation2 + $0x8] sm:$0xff]
    %v84 = vld [vmem:[#allocation2 + $0x10] sm:$0xff]
    %v85 = vld [vmem:[#allocation2 + $0x18] sm:$0xff]
    %v86 = vld [vmem:[#allocation2 + $0x20] sm:$0xff]
    %v87 = vld [vmem:[#allocation2 + $0x28] sm:$0xff]
    %v88 = vld [vmem:[#allocation2 + $0x30] sm:$0xff]
    %v89 = vld [vmem:[#allocation2 + $0x38] sm:$0xff]
    %v90 = vld [vmem:[#allocation2 + $0x40] sm:$0xff]
    %v91 = vld [vmem:[#allocation2 + $0x48] sm:$0xff]
    %v92 = vld [vmem:[#allocation2 + $0x50] sm:$0xff]
    %v93 = vld [vmem:[#allocation2 + $0x58] sm:$0xff]
    %v94 = vld [vmem:[#allocation2 + $0x60] sm:$0xff]
    %v95 = vld [vmem:[#allocation2 + $0x68] sm:$0xff]
    %v96 = vld [vmem:[#allocation2 + $0x70] sm:$0xff]
    %v97 = vld [vmem:[#allocation2 + $0x78] sm:$0xff]
    %v98 = vld [vmem:[#allocation5] sm:$0xff]
    %v99 = vld [vmem:[#allocation5 + $0x8] sm:$0xff]
    %v100 = vld [vmem:[#allocation5 + $0x10] sm:$0xff]
    %v101 = vld [vmem:[#allocation5 + $0x18] sm:$0xff]
    %v102 = vld [vmem:[#allocation5 + $0x20] sm:$0xff]
    %v103 = vld [vmem:[#allocation5 + $0x28] sm:$0xff]
    %v104 = vld [vmem:[#allocation5 + $0x30] sm:$0xff]
    %v105 = vld [vmem:[#allocation5 + $0x38] sm:$0xff]
    %v106 = vld [vmem:[#allocation5 + $0x40] sm:$0xff]
    %v107 = vld [vmem:[#allocation5 + $0x48] sm:$0xff]
    %v108 = vld [vmem:[#allocation5 + $0x50] sm:$0xff]
    %v109 = vld [vmem:[#allocation5 + $0x58] sm:$0xff]
    %v110 = vld [vmem:[#allocation5 + $0x60] sm:$0xff]
    %v111 = vld [vmem:[#allocation5 + $0x68] sm:$0xff]
    %v112 = vld [vmem:[#allocation5 + $0x70] sm:$0xff]
    %v113 = vld [vmem:[#allocation5 + $0x78] sm:$0xff]
    %v114 = vld [vmem:[#allocation5 + $0x80] sm:$0xff]
    %v115 = vld [vmem:[#allocation5 + $0x88] sm:$0xff]
    %v116 = vld [vmem:[#allocation5 + $0x90] sm:$0xff]
    %v117 = vld [vmem:[#allocation5 + $0x98] sm:$0xff]
    %v118 = vld [vmem:[#allocation5 + $0xa0] sm:$0xff]
    %v119 = vld [vmem:[#allocation5 + $0xa8] sm:$0xff]
    %v120 = vld [vmem:[#allocation5 + $0xb0] sm:$0xff]
    %v121 = vld [vmem:[#allocation5 + $0xb8] sm:$0xff]
    %v122 = vld [vmem:[#allocation5 + $0xc0] sm:$0xff]
    %v123 = vld [vmem:[#allocation5 + $0xc8] sm:$0xff]
    %v124 = vld [vmem:[#allocation5 + $0xd0] sm:$0xff]
    %v125 = vld [vmem:[#allocation5 + $0xd8] sm:$0xff]
    %v126 = vld [vmem:[#allocation5 + $0xe0] sm:$0xff]
    %v127 = vld [vmem:[#allocation5 + $0xe8] sm:$0xff]
    %v128 = vld [vmem:[#allocation5 + $0xf0] sm:$0xff]
    %v129 = vld [vmem:[#allocation5 + $0xf8] sm:$0xff]
    %v130 = vld [vmem:[#allocation5 + $0x100] sm:$0xff]
    %v131 = vld [vmem:[#allocation5 + $0x108] sm:$0xff]
    %v132 = vld [vmem:[#allocation5 + $0x110] sm:$0xff]
    %v133 = vld [vmem:[#allocation5 + $0x118] sm:$0xff]
    %v134 = vld [vmem:[#allocation5 + $0x120] sm:$0xff]
    %v135 = vld [vmem:[#allocation5 + $0x128] sm:$0xff]
    %v136 = vld [vmem:[#allocation5 + $0x130] sm:$0xff]
    %v137 = vld [vmem:[#allocation5 + $0x138] sm:$0xff]
    %v138 = vld [vmem:[#allocation5 + $0x140] sm:$0xff]
    %v139 = vld [vmem:[#allocation5 + $0x148] sm:$0xff]
    %v140 = vld [vmem:[#allocation5 + $0x150] sm:$0xff]
    %v141 = vld [vmem:[#allocation5 + $0x158] sm:$0xff]
    %v142 = vld [vmem:[#allocation5 + $0x160] sm:$0xff]
    %v143 = vld [vmem:[#allocation5 + $0x168] sm:$0xff]
    %v144 = vld [vmem:[#allocation5 + $0x170] sm:$0xff]
    %v145 = vld [vmem:[#allocation5 + $0x178] sm:$0xff]
    %v146 = vld [vmem:[#allocation5 + $0x180] sm:$0xff]
    %v147 = vld [vmem:[#allocation5 + $0x188] sm:$0xff]
    %v148 = vld [vmem:[#allocation5 + $0x190] sm:$0xff]
    %v149 = vld [vmem:[#allocation5 + $0x198] sm:$0xff]
    %v150 = vld [vmem:[#allocation5 + $0x1a0] sm:$0xff]
    %v151 = vld [vmem:[#allocation5 + $0x1a8] sm:$0xff]
    %v152 = vld [vmem:[#allocation5 + $0x1b0] sm:$0xff]
    %v153 = vld [vmem:[#allocation5 + $0x1b8] sm:$0xff]
    %v154 = vld [vmem:[#allocation5 + $0x1c0] sm:$0xff]
    %v155 = vld [vmem:[#allocation5 + $0x1c8] sm:$0xff]
    %v156 = vld [vmem:[#allocation5 + $0x1d0] sm:$0xff]
    %v157 = vld [vmem:[#allocation5 + $0x1d8] sm:$0xff]
    %v158 = vld [vmem:[#allocation5 + $0x1e0] sm:$0xff]
    %v159 = vld [vmem:[#allocation5 + $0x1e8] sm:$0xff]
    %v160 = vld [vmem:[#allocation5 + $0x1f0] sm:$0xff]
    %v161 = vld [vmem:[#allocation5 + $0x1f8] sm:$0xff]
    %v162 = vld [vmem:[%s2] sm:$0x1]
    %v164 = vlaneseq
    %v165 = vshrl.u32 %v164, 7
    %v166 = vsub.s32 0, %v165
    %v167 = vrot.slane %v162, %v166
    %169 = vmatprep.subr.mxu0 0.0
    %170 = vmatpush1.msra.mxu0 %v98
    %171 = vmatprep.subr.mxu0 0.0
    %172 = vmatpush1.msra.mxu0 %v99
    %173 = vmatprep.subr.mxu0 0.0
    %174 = vmatpush1.msra.mxu0 %v100
    %175 = vmatprep.subr.mxu0 0.0
    %176 = vmatpush1.msra.mxu0 %v101
    %177 = vmatprep.subr.mxu0 0.0
    %178 = vmatpush1.msra.mxu0 %v102
    %179 = vmatprep.subr.mxu0 0.0
    %180 = vmatpush1.msra.mxu0 %v103
    %181 = vmatprep.subr.mxu0 0.0
    %182 = vmatpush1.msra.mxu0 %v104
    %183 = vmatprep.subr.mxu0 0.0
    %184 = vmatpush1.msra.mxu0 %v105
    %185 = vmatprep.subr.mxu0 0.0
    %186 = vmatpush1.msra.mxu0 %v106
    %187 = vmatprep.subr.mxu0 0.0
    %188 = vmatpush1.msra.mxu0 %v107
    %189 = vmatprep.subr.mxu0 0.0
    %190 = vmatpush1.msra.mxu0 %v108
    %191 = vmatprep.subr.mxu0 0.0
    %192 = vmatpush1.msra.mxu0 %v109
    %193 = vmatprep.subr.mxu0 0.0
    %194 = vmatpush1.msra.mxu0 %v110
    %195 = vmatprep.subr.mxu0 0.0
    %196 = vmatpush1.msra.mxu0 %v111
    %197 = vmatprep.subr.mxu0 0.0
    %198 = vmatpush1.msra.mxu0 %v112
    %199 = vmatprep.subr.mxu0 0.0
    %200 = vmatpush1.msra.mxu0 %v113
    %201 = vmatprep.subr.mxu0 0.0
    %202 = vmatpush1.msra.mxu0 %v114
    %203 = vmatprep.subr.mxu0 0.0
    %204 = vmatpush1.msra.mxu0 %v115
    %205 = vmatprep.subr.mxu0 0.0
    %206 = vmatpush1.msra.mxu0 %v116
    %207 = vmatprep.subr.mxu0 0.0
    %208 = vmatpush1.msra.mxu0 %v117
    %209 = vmatprep.subr.mxu0 0.0
    %210 = vmatpush1.msra.mxu0 %v118
    %211 = vmatprep.subr.mxu0 0.0
    %212 = vmatpush1.msra.mxu0 %v119
    %213 = vmatprep.subr.mxu0 0.0
    %214 = vmatpush1.msra.mxu0 %v120
    %215 = vmatprep.subr.mxu0 0.0
    %216 = vmatpush1.msra.mxu0 %v121
    %217 = vmatprep.subr.mxu0 0.0
    %218 = vmatpush1.msra.mxu0 %v122
    %219 = vmatprep.subr.mxu0 0.0
    %220 = vmatpush1.msra.mxu0 %v123
    %221 = vmatprep.subr.mxu0 0.0
    %222 = vmatpush1.msra.mxu0 %v124
    %223 = vmatprep.subr.mxu0 0.0
    %224 = vmatpush1.msra.mxu0 %v125
    %225 = vmatprep.subr.mxu0 0.0
    %226 = vmatpush1.msra.mxu0 %v126
    %227 = vmatprep.subr.mxu0 0.0
    %228 = vmatpush1.msra.mxu0 %v127
    %229 = vmatprep.subr.mxu0 0.0
    %230 = vmatpush1.msra.mxu0 %v128
    %231 = vmatprep.subr.mxu0 0.0
    %232 = vmatpush1.msra.mxu0 %v129
    %233 = vmatprep.mubr.f32.mxu0 %v83
    %234 = vmatmul.mubr.f32.gmra.mrb[0].mxu0 %v82
    %v235 = vpop.f32.mrb[0].mxu0
    %v236 = vadd.f32 %v167, %v235
    %v237 = vpop.f32.mrb[0].mxu0
    %238 = vmatprep.mubr.f32.mxu0 %v87
    %239 = vmatmul.mubr.f32.gmra.mrb[0].mxu0 %v86
    %v240 = vpop.f32.mrb[0].mxu0
    %v241 = vadd.f32 %v167, %v240
    %v242 = vpop.f32.mrb[0].mxu0
    %243 = vmatprep.mubr.f32.mxu0 %v91
    %244 = vmatmul.mubr.f32.gmra.mrb[0].mxu0 %v90
    %v245 = vpop.f32.mrb[0].mxu0
    %v246 = vadd.f32 %v167, %v245
    %v247 = vpop.f32.mrb[0].mxu0
    %248 = vmatprep.mubr.f32.mxu0 %v95
    %249 = vmatmul.mubr.f32.gmra.mrb[0].mxu0 %v94
    %v250 = vpop.f32.mrb[0].mxu0
    %v251 = vadd.f32 %v167, %v250
    %v252 = vpop.f32.mrb[0].mxu0
    %253 = vdwg.mxu0
    %254 = vmatprep.subr.mxu0 0.0
    %255 = vmatpush1.msra.mxu0 %v130
    %256 = vmatprep.subr.mxu0 0.0
    %257 = vmatpush1.msra.mxu0 %v131
    %258 = vmatprep.subr.mxu0 0.0
    %259 = vmatpush1.msra.mxu0 %v132
    %260 = vmatprep.subr.mxu0 0.0
    %261 = vmatpush1.msra.mxu0 %v133
    %262 = vmatprep.subr.mxu0 0.0
    %263 = vmatpush1.msra.mxu0 %v134
    %264 = vmatprep.subr.mxu0 0.0
    %265 = vmatpush1.msra.mxu0 %v135
    %266 = vmatprep.subr.mxu0 0.0
    %267 = vmatpush1.msra.mxu0 %v136
    %268 = vmatprep.subr.mxu0 0.0
    %269 = vmatpush1.msra.mxu0 %v137
    %270 = vmatprep.subr.mxu0 0.0
    %271 = vmatpush1.msra.mxu0 %v138
    %272 = vmatprep.subr.mxu0 0.0
    %273 = vmatpush1.msra.mxu0 %v139
    %274 = vmatprep.subr.mxu0 0.0
    %275 = vmatpush1.msra.mxu0 %v140
    %276 = vmatprep.subr.mxu0 0.0
    %277 = vmatpush1.msra.mxu0 %v141
    %278 = vmatprep.subr.mxu0 0.0
    %279 = vmatpush1.msra.mxu0 %v142
    %280 = vmatprep.subr.mxu0 0.0
    %281 = vmatpush1.msra.mxu0 %v143
    %282 = vmatprep.subr.mxu0 0.0
    %283 = vmatpush1.msra.mxu0 %v144
    %284 = vmatprep.subr.mxu0 0.0
    %285 = vmatpush1.msra.mxu0 %v145
    %286 = vmatprep.subr.mxu0 0.0
    %287 = vmatpush1.msra.mxu0 %v146
    %288 = vmatprep.subr.mxu0 0.0
    %289 = vmatpush1.msra.mxu0 %v147
    %290 = vmatprep.subr.mxu0 0.0
    %291 = vmatpush1.msra.mxu0 %v148
    %292 = vmatprep.subr.mxu0 0.0
    %293 = vmatpush1.msra.mxu0 %v149
    %294 = vmatprep.subr.mxu0 0.0
    %295 = vmatpush1.msra.mxu0 %v150
    %296 = vmatprep.subr.mxu0 0.0
    %297 = vmatpush1.msra.mxu0 %v151
    %298 = vmatprep.subr.mxu0 0.0
    %299 = vmatpush1.msra.mxu0 %v152
    %300 = vmatprep.subr.mxu0 0.0
    %301 = vmatpush1.msra.mxu0 %v153
    %302 = vmatprep.subr.mxu0 0.0
    %303 = vmatpush1.msra.mxu0 %v154
    %304 = vmatprep.subr.mxu0 0.0
    %305 = vmatpush1.msra.mxu0 %v155
    %306 = vmatprep.subr.mxu0 0.0
    %307 = vmatpush1.msra.mxu0 %v156
    %308 = vmatprep.subr.mxu0 0.0
    %309 = vmatpush1.msra.mxu0 %v157
    %310 = vmatprep.subr.mxu0 0.0
    %311 = vmatpush1.msra.mxu0 %v158
    %312 = vmatprep.subr.mxu0 0.0
    %313 = vmatpush1.msra.mxu0 %v159
    %314 = vmatprep.subr.mxu0 0.0
    %315 = vmatpush1.msra.mxu0 %v160
    %316 = vmatprep.subr.mxu0 0.0
    %317 = vmatpush1.msra.mxu0 %v161
    %318 = vmatprep.mubr.f32.mxu0 %v85
    %319 = vmatmul.mubr.f32.gmra.mrb[0].mxu0 %v84
    %v320 = vpop.f32.mrb[0].mxu0
    %v321 = vadd.f32 %v236, %v320
    %v322 = vpop.f32.mrb[0].mxu0
    %323 = vmatprep.mubr.f32.mxu0 %v89
    %324 = vmatmul.mubr.f32.gmra.mrb[0].mxu0 %v88
    %v325 = vpop.f32.mrb[0].mxu0
    %v326 = vadd.f32 %v241, %v325
    %v327 = vpop.f32.mrb[0].mxu0
    %328 = vmatprep.mubr.f32.mxu0 %v93
    %329 = vmatmul.mubr.f32.gmra.mrb[0].mxu0 %v92
    %v330 = vpop.f32.mrb[0].mxu0
    %v331 = vadd.f32 %v246, %v330
    %v332 = vpop.f32.mrb[0].mxu0
    %333 = vmatprep.mubr.f32.mxu0 %v97
    %334 = vmatmul.mubr.f32.gmra.mrb[0].mxu0 %v96
    %v335 = vpop.f32.mrb[0].mxu0
    %v336 = vadd.f32 %v251, %v335
    %v337 = vpop.f32.mrb[0].mxu0
    %338 = vdwg.mxu0
    %v339 = vmax.f32 %v321, 0.0
    %v340 = vmax.f32 %v326, 0.0
    %v341 = vmax.f32 %v331, 0.0
    %v342 = vmax.f32 %v336, 0.0
    %v343 = vlaneseq
    %v344 = vshrl.u32 %v343, 7
    %v345 = vadd.s32 %v344, 8
    %v346 = vadd.s32 %v344, 16
    %v347 = vadd.s32 %v344, 24
    %vm348 = vcmp.lt.s32.totalorder %v344, 0
    %v349 = vsub.s32 0, %v344
    %v350 = vsel %vm348, %v349, %v344
    %v351 = vshrl.u32 %v350, 4
    %v352 = vand.u32 %v350, 15
    %v353 = vsub.s32 0, %v352
    %v354 = vsel %vm348, %v353, %v352
    %vm355 = vcmp.lt.s32.totalorder %v345, 0
    %v356 = vsub.s32 0, %v345
    %v357 = vsel %vm355, %v356, %v345
    %v358 = vshrl.u32 %v357, 4
    %v359 = vand.u32 %v357, 15
    %v360 = vsub.s32 0, %v359
    %v361 = vsel %vm355, %v360, %v359
    %vm362 = vcmp.lt.s32.totalorder %v346, 0
    %v363 = vsub.s32 0, %v346
    %v364 = vsel %vm362, %v363, %v346
    %v365 = vshrl.u32 %v364, 4
    %v366 = vand.u32 %v364, 15
    %v367 = vsub.s32 0, %v366
    %v368 = vsel %vm362, %v367, %v366
    %vm369 = vcmp.lt.s32.totalorder %v347, 0
    %v370 = vsub.s32 0, %v347
    %v371 = vsel %vm369, %v370, %v347
    %v372 = vshrl.u32 %v371, 4
    %v373 = vand.u32 %v371, 15
    %v374 = vsub.s32 0, %v373
    %v375 = vsel %vm369, %v374, %v373
    %vm376 = vcmp.ne.s32.totalorder %v354, 0
    %vm377 = vcmp.ne.s32.totalorder %v361, 0
    %vm378 = vcmp.ne.s32.totalorder %v368, 0
    %vm379 = vcmp.ne.s32.totalorder %v375, 0
    %vm380 = vcmp.lt.s32.totalorder %v354, 0
    %vm381 = vcmp.lt.s32.totalorder %v361, 0
    %vm382 = vcmp.lt.s32.totalorder %v368, 0
    %vm383 = vcmp.lt.s32.totalorder %v375, 0
    %vm384 = vmand %vm380, %vm376
    %vm385 = vmand %vm381, %vm377
    %vm386 = vmand %vm382, %vm378
    %vm387 = vmand %vm383, %vm379
    %v388 = vadd.s32 %v354, 16
    %v389 = vadd.s32 %v361, 16
    %v390 = vadd.s32 %v368, 16
    %v391 = vadd.s32 %v375, 16
    %v392 = vsel %vm384, %v388, %v354
    %v393 = vsel %vm385, %v389, %v361
    %v394 = vsel %vm386, %v390, %v368
    %v395 = vsel %vm387, %v391, %v375
    %vm396 = vcmp.ne.s32.totalorder %v392, 0
    %vm397 = vcmp.ne.s32.totalorder %v393, 0
    %vm398 = vcmp.ne.s32.totalorder %v394, 0
    %vm399 = vcmp.ne.s32.totalorder %v395, 0
    %vm400 = vcmp.ne.s32.totalorder %v392, 15
    %vm401 = vcmp.ne.s32.totalorder %v393, 15
    %vm402 = vcmp.ne.s32.totalorder %v394, 15
    %vm403 = vcmp.ne.s32.totalorder %v395, 15
    %v404 = vld [vmem:[#allocation7] sm:$0xff]
    %v405 = vld [vmem:[#allocation7 + $0x8] sm:$0x1]
    %vm410 = vcmask 1040384
    %v411 = vrot.slane %v339, 7
    %v412 = vrot.slane %v340, 7
    %v413 = vsel %vm410, %v411, %v412
    %v414 = vrot.slane %v341, 7
    %v415 = vsel %vm410, %v412, %v414
    %v416 = vrot.slane %v342, 7
    %v417 = vsel %vm410, %v414, %v416
    %v422 = vsel %vm410, 0.0, %v411
    %v423 = vsel %vm396, %v422, 0.0
    %v424 = vsel %vm397, %v413, 0.0
    %v425 = vsel %vm398, %v415, 0.0
    %v426 = vsel %vm399, %v417, 0.0
    %431 = vrot.lane.b32.xlu0 %v423, 8
    %v432 = vpop.permute.xlu0 %431
    %433 = vrot.lane.b32.xlu0 %v424, 8
    %v434 = vpop.permute.xlu0 %433
    %435 = vrot.lane.b32.xlu0 %v425, 8
    %v436 = vpop.permute.xlu0 %435
    %437 = vrot.lane.b32.xlu0 %v426, 8
    %v438 = vpop.permute.xlu0 %437
    %vm443 = vcmask 64512
    %v444 = vsel %vm443, 0.0, %v432
    %v445 = vsel %vm443, 0.0, %v434
    %v446 = vsel %vm443, 0.0, %v436
    %v447 = vsel %vm443, 0.0, %v438
    %v448 = vsel %vm443, %v432, 0.0
    %v449 = vsel %vm443, %v434, 0.0
    %v450 = vsel %vm443, %v436, 0.0
    %v451 = vsel %vm443, %v438, 0.0
    %v452 = vlaneseq
    %v453 = vshrl.u32 %v452, 7
    %v454 = vsub.s32 0, %v453
    %v455 = vrot.slane %v404, %v454
    %v456 = vmul.f32 %v444, %v455
    %v457 = vmul.f32 %v445, %v455
    %v458 = vmul.f32 %v446, %v455
    %v459 = vmul.f32 %v447, %v455
    %v460 = vadd.f32 %v456, 0.0
    %v461 = vadd.f32 %v457, 0.0
    %v462 = vadd.f32 %v458, 0.0
    %v463 = vadd.f32 %v459, 0.0
    %v464 = vlaneseq
    %v465 = vshrl.u32 %v464, 7
    %v466 = vsub.s32 1, %v465
    %v467 = vrot.slane %v404, %v466
    %469 = vrot.lane.b32.xlu0 %v467, 8
    %v470 = vpop.permute.xlu0 %469
    %v472 = vmul.f32 %v444, %v470
    %v473 = vmul.f32 %v448, %v470
    %v474 = vmul.f32 %v445, %v470
    %v475 = vmul.f32 %v449, %v470
    %v476 = vmul.f32 %v446, %v470
    %v477 = vmul.f32 %v450, %v470
    %v478 = vmul.f32 %v447, %v470
    %v479 = vmul.f32 %v451, %v470
    %488 = vrot.lane.b32.xlu0 %v472, 120
    %v489 = vpop.permute.xlu0 %488
    %490 = vrot.lane.b32.xlu0 %v473, 120
    %v491 = vpop.permute.xlu0 %490
    %492 = vrot.lane.b32.xlu0 %v474, 120
    %v493 = vpop.permute.xlu0 %492
    %494 = vrot.lane.b32.xlu0 %v475, 120
    %v495 = vpop.permute.xlu0 %494
    %496 = vrot.lane.b32.xlu0 %v476, 120
    %v497 = vpop.permute.xlu0 %496
    %498 = vrot.lane.b32.xlu0 %v477, 120
    %v499 = vpop.permute.xlu0 %498
    %500 = vrot.lane.b32.xlu0 %v478, 120
    %v501 = vpop.permute.xlu0 %500
    %502 = vrot.lane.b32.xlu0 %v479, 120
    %v503 = vpop.permute.xlu0 %502
    %vm504 = vcmask 982016
    %v505 = vsel %vm504, %v489, %v491
    %v506 = vsel %vm504, %v493, %v495
    %v507 = vsel %vm504, %v497, %v499
    %v508 = vsel %vm504, %v501, %v503
    %v513 = vadd.f32 %v460, %v505
    %v514 = vadd.f32 %v461, %v506
    %v515 = vadd.f32 %v462, %v507
    %v516 = vadd.f32 %v463, %v508
    %v517 = vlaneseq
    %v518 = vshrl.u32 %v517, 7
    %v519 = vsub.s32 2, %v518
    %v520 = vrot.slane %v404, %v519
    %522 = vrot.lane.b32.xlu0 %v520, 16
    %v523 = vpop.permute.xlu0 %522
    %v525 = vmul.f32 %v444, %v523
    %v526 = vmul.f32 %v448, %v523
    %v527 = vmul.f32 %v445, %v523
    %v528 = vmul.f32 %v449, %v523
    %v529 = vmul.f32 %v446, %v523
    %v530 = vmul.f32 %v450, %v523
    %v531 = vmul.f32 %v447, %v523
    %v532 = vmul.f32 %v451, %v523
    %541 = vrot.lane.b32.xlu0 %v525, 112
    %v542 = vpop.permute.xlu0 %541
    %543 = vrot.lane.b32.xlu0 %v526, 112
    %v544 = vpop.permute.xlu0 %543
    %545 = vrot.lane.b32.xlu0 %v527, 112
    %v546 = vpop.permute.xlu0 %545
    %547 = vrot.lane.b32.xlu0 %v528, 112
    %v548 = vpop.permute.xlu0 %547
    %549 = vrot.lane.b32.xlu0 %v529, 112
    %v550 = vpop.permute.xlu0 %549
    %551 = vrot.lane.b32.xlu0 %v530, 112
    %v552 = vpop.permute.xlu0 %551
    %553 = vrot.lane.b32.xlu0 %v531, 112
    %v554 = vpop.permute.xlu0 %553
    %555 = vrot.lane.b32.xlu0 %v532, 112
    %v556 = vpop.permute.xlu0 %555
    %vm557 = vcmask 916480
    %v558 = vsel %vm557, %v542, %v544
    %v559 = vsel %vm557, %v546, %v548
    %v560 = vsel %vm557, %v550, %v552
    %v561 = vsel %vm557, %v554, %v556
    %v566 = vadd.f32 %v513, %v558
    %v567 = vadd.f32 %v514, %v559
    %v568 = vadd.f32 %v515, %v560
    %v569 = vadd.f32 %v516, %v561
    %570 = vrot.lane.b32.xlu0 %v339, 8
    %v571 = vpop.permute.xlu0 %570
    %572 = vrot.lane.b32.xlu0 %v340, 8
    %v573 = vpop.permute.xlu0 %572
    %574 = vrot.lane.b32.xlu0 %v341, 8
    %v575 = vpop.permute.xlu0 %574
    %576 = vrot.lane.b32.xlu0 %v342, 8
    %v577 = vpop.permute.xlu0 %576
    %v582 = vsel %vm443, 0.0, %v571
    %v583 = vsel %vm443, 0.0, %v573
    %v584 = vsel %vm443, 0.0, %v575
    %v585 = vsel %vm443, 0.0, %v577
    %v586 = vsel %vm443, %v571, 0.0
    %v587 = vsel %vm443, %v573, 0.0
    %v588 = vsel %vm443, %v575, 0.0
    %v589 = vsel %vm443, %v577, 0.0
    %v590 = vlaneseq
    %v591 = vshrl.u32 %v590, 7
    %v592 = vsub.s32 3, %v591
    %v593 = vrot.slane %v404, %v592
    %v594 = vmul.f32 %v582, %v593
    %v595 = vmul.f32 %v583, %v593
    %v596 = vmul.f32 %v584, %v593
    %v597 = vmul.f32 %v585, %v593
    %v598 = vadd.f32 %v566, %v594
    %v599 = vadd.f32 %v567, %v595
    %v600 = vadd.f32 %v568, %v596
    %v601 = vadd.f32 %v569, %v597
    %v602 = vlaneseq
    %v603 = vshrl.u32 %v602, 7
    %v604 = vsub.s32 4, %v603
    %v605 = vrot.slane %v404, %v604
    %607 = vrot.lane.b32.xlu0 %v605, 8
    %v608 = vpop.permute.xlu0 %607
    %v610 = vmul.f32 %v582, %v608
    %v611 = vmul.f32 %v586, %v608
    %v612 = vmul.f32 %v583, %v608
    %v613 = vmul.f32 %v587, %v608
    %v614 = vmul.f32 %v584, %v608
    %v615 = vmul.f32 %v588, %v608
    %v616 = vmul.f32 %v585, %v608
    %v617 = vmul.f32 %v589, %v608
    %626 = vrot.lane.b32.xlu0 %v610, 120
    %v627 = vpop.permute.xlu0 %626
    %628 = vrot.lane.b32.xlu0 %v611, 120
    %v629 = vpop.permute.xlu0 %628
    %630 = vrot.lane.b32.xlu0 %v612, 120
    %v631 = vpop.permute.xlu0 %630
    %632 = vrot.lane.b32.xlu0 %v613, 120
    %v633 = vpop.permute.xlu0 %632
    %634 = vrot.lane.b32.xlu0 %v614, 120
    %v635 = vpop.permute.xlu0 %634
    %636 = vrot.lane.b32.xlu0 %v615, 120
    %v637 = vpop.permute.xlu0 %636
    %638 = vrot.lane.b32.xlu0 %v616, 120
    %v639 = vpop.permute.xlu0 %638
    %640 = vrot.lane.b32.xlu0 %v617, 120
    %v641 = vpop.permute.xlu0 %640
    %v642 = vsel %vm504, %v627, %v629
    %v643 = vsel %vm504, %v631, %v633
    %v644 = vsel %vm504, %v635, %v637
    %v645 = vsel %vm504, %v639, %v641
    %v650 = vadd.f32 %v598, %v642
    %v651 = vadd.f32 %v599, %v643
    %v652 = vadd.f32 %v600, %v644
    %v653 = vadd.f32 %v601, %v645
    %v654 = vlaneseq
    %v655 = vshrl.u32 %v654, 7
    %v656 = vsub.s32 5, %v655
    %v657 = vrot.slane %v404, %v656
    %659 = vrot.lane.b32.xlu0 %v657, 16
    %v660 = vpop.permute.xlu0 %659
    %v662 = vmul.f32 %v582, %v660
    %v663 = vmul.f32 %v586, %v660
    %v664 = vmul.f32 %v583, %v660
    %v665 = vmul.f32 %v587, %v660
    %v666 = vmul.f32 %v584, %v660
    %v667 = vmul.f32 %v588, %v660
    %v668 = vmul.f32 %v585, %v660
    %v669 = vmul.f32 %v589, %v660
    %678 = vrot.lane.b32.xlu0 %v662, 112
    %v679 = vpop.permute.xlu0 %678
    %680 = vrot.lane.b32.xlu0 %v663, 112
    %v681 = vpop.permute.xlu0 %680
    %682 = vrot.lane.b32.xlu0 %v664, 112
    %v683 = vpop.permute.xlu0 %682
    %684 = vrot.lane.b32.xlu0 %v665, 112
    %v685 = vpop.permute.xlu0 %684
    %686 = vrot.lane.b32.xlu0 %v666, 112
    %v687 = vpop.permute.xlu0 %686
    %688 = vrot.lane.b32.xlu0 %v667, 112
    %v689 = vpop.permute.xlu0 %688
    %690 = vrot.lane.b32.xlu0 %v668, 112
    %v691 = vpop.permute.xlu0 %690
    %692 = vrot.lane.b32.xlu0 %v669, 112
    %v693 = vpop.permute.xlu0 %692
    %v694 = vsel %vm557, %v679, %v681
    %v695 = vsel %vm557, %v683, %v685
    %v696 = vsel %vm557, %v687, %v689
    %v697 = vsel %vm557, %v691, %v693
    %v702 = vadd.f32 %v650, %v694
    %v703 = vadd.f32 %v651, %v695
    %v704 = vadd.f32 %v652, %v696
    %v705 = vadd.f32 %v653, %v697
    %vm706 = vcmask 1046528
    %v707 = vrot.slane %v339, 1
    %v708 = vrot.slane %v340, 1
    %v709 = vsel %vm706, %v707, %v708
    %v710 = vrot.slane %v341, 1
    %v711 = vsel %vm706, %v708, %v710
    %v712 = vrot.slane %v342, 1
    %v713 = vsel %vm706, %v710, %v712
    %v718 = vsel %vm706, %v712, 0.0
    %v719 = vsel %vm400, %v709, 0.0
    %v720 = vsel %vm401, %v711, 0.0
    %v721 = vsel %vm402, %v713, 0.0
    %v722 = vsel %vm403, %v718, 0.0
    %727 = vrot.lane.b32.xlu0 %v719, 8
    %v728 = vpop.permute.xlu0 %727
    %729 = vrot.lane.b32.xlu0 %v720, 8
    %v730 = vpop.permute.xlu0 %729
    %731 = vrot.lane.b32.xlu0 %v721, 8
    %v732 = vpop.permute.xlu0 %731
    %733 = vrot.lane.b32.xlu0 %v722, 8
    %v734 = vpop.permute.xlu0 %733
    %v739 = vsel %vm443, 0.0, %v728
    %v740 = vsel %vm443, 0.0, %v730
    %v741 = vsel %vm443, 0.0, %v732
    %v742 = vsel %vm443, 0.0, %v734
    %v743 = vsel %vm443, %v728, 0.0
    %v744 = vsel %vm443, %v730, 0.0
    %v745 = vsel %vm443, %v732, 0.0
    %v746 = vsel %vm443, %v734, 0.0
    %v747 = vlaneseq
    %v748 = vshrl.u32 %v747, 7
    %v749 = vsub.s32 6, %v748
    %v750 = vrot.slane %v404, %v749
    %v751 = vmul.f32 %v739, %v750
    %v752 = vmul.f32 %v740, %v750
    %v753 = vmul.f32 %v741, %v750
    %v754 = vmul.f32 %v742, %v750
    %v755 = vadd.f32 %v702, %v751
    %v756 = vadd.f32 %v703, %v752
    %v757 = vadd.f32 %v704, %v753
    %v758 = vadd.f32 %v705, %v754
    %v759 = vlaneseq
    %v760 = vshrl.u32 %v759, 7
    %v761 = vsub.s32 7, %v760
    %v762 = vrot.slane %v404, %v761
    %764 = vrot.lane.b32.xlu0 %v762, 8
    %v765 = vpop.permute.xlu0 %764
    %v767 = vmul.f32 %v739, %v765
    %v768 = vmul.f32 %v743, %v765
    %v769 = vmul.f32 %v740, %v765
    %v770 = vmul.f32 %v744, %v765
    %v771 = vmul.f32 %v741, %v765
    %v772 = vmul.f32 %v745, %v765
    %v773 = vmul.f32 %v742, %v765
    %v774 = vmul.f32 %v746, %v765
    %783 = vrot.lane.b32.xlu0 %v767, 120
    %v784 = vpop.permute.xlu0 %783
    %785 = vrot.lane.b32.xlu0 %v768, 120
    %v786 = vpop.permute.xlu0 %785
    %787 = vrot.lane.b32.xlu0 %v769, 120
    %v788 = vpop.permute.xlu0 %787
    %789 = vrot.lane.b32.xlu0 %v770, 120
    %v790 = vpop.permute.xlu0 %789
    %791 = vrot.lane.b32.xlu0 %v771, 120
    %v792 = vpop.permute.xlu0 %791
    %793 = vrot.lane.b32.xlu0 %v772, 120
    %v794 = vpop.permute.xlu0 %793
    %795 = vrot.lane.b32.xlu0 %v773, 120
    %v796 = vpop.permute.xlu0 %795
    %797 = vrot.lane.b32.xlu0 %v774, 120
    %v798 = vpop.permute.xlu0 %797
    %v799 = vsel %vm504, %v784, %v786
    %v800 = vsel %vm504, %v788, %v790
    %v801 = vsel %vm504, %v792, %v794
    %v802 = vsel %vm504, %v796, %v798
    %v807 = vadd.f32 %v755, %v799
    %v808 = vadd.f32 %v756, %v800
    %v809 = vadd.f32 %v757, %v801
    %v810 = vadd.f32 %v758, %v802
    %v811 = vlaneseq
    %v812 = vshrl.u32 %v811, 7
    %v813 = vsub.s32 0, %v812
    %v814 = vrot.slane %v405, %v813
    %816 = vrot.lane.b32.xlu0 %v814, 16
    %v817 = vpop.permute.xlu0 %816
    %v819 = vmul.f32 %v739, %v817
    %v820 = vmul.f32 %v743, %v817
    %v821 = vmul.f32 %v740, %v817
    %v822 = vmul.f32 %v744, %v817
    %v823 = vmul.f32 %v741, %v817
    %v824 = vmul.f32 %v745, %v817
    %v825 = vmul.f32 %v742, %v817
    %v826 = vmul.f32 %v746, %v817
    %835 = vrot.lane.b32.xlu0 %v819, 112
    %v836 = vpop.permute.xlu0 %835
    %837 = vrot.lane.b32.xlu0 %v820, 112
    %v838 = vpop.permute.xlu0 %837
    %839 = vrot.lane.b32.xlu0 %v821, 112
    %v840 = vpop.permute.xlu0 %839
    %841 = vrot.lane.b32.xlu0 %v822, 112
    %v842 = vpop.permute.xlu0 %841
    %843 = vrot.lane.b32.xlu0 %v823, 112
    %v844 = vpop.permute.xlu0 %843
    %845 = vrot.lane.b32.xlu0 %v824, 112
    %v846 = vpop.permute.xlu0 %845
    %847 = vrot.lane.b32.xlu0 %v825, 112
    %v848 = vpop.permute.xlu0 %847
    %849 = vrot.lane.b32.xlu0 %v826, 112
    %v850 = vpop.permute.xlu0 %849
    %v851 = vsel %vm557, %v836, %v838
    %v852 = vsel %vm557, %v840, %v842
    %v853 = vsel %vm557, %v844, %v846
    %v854 = vsel %vm557, %v848, %v850
    %v859 = vadd.f32 %v807, %v851
    %v860 = vadd.f32 %v808, %v852
    %v861 = vadd.f32 %v809, %v853
    %v862 = vadd.f32 %v810, %v854
    %v863 = vld [vmem:[%s4] sm:$0x1]
    %v865 = vlaneseq
    %v866 = vshrl.u32 %v865, 7
    %v867 = vsub.s32 0, %v866
    %v868 = vrot.slane %v863, %v867
    %v870 = vadd.f32 %v859, %v868
    %v871 = vadd.f32 %v860, %v868
    %v872 = vadd.f32 %v861, %v868
    %v873 = vadd.f32 %v862, %v868
    %v874 = vld [vmem:[#allocation8] sm:$0xff]
    %v875 = vld [vmem:[#allocation8 + $0x8] sm:$0xff]
    %v876 = vld [vmem:[#allocation8 + $0x10] sm:$0xff]
    %v877 = vld [vmem:[#allocation8 + $0x18] sm:$0xff]
    %v878 = vld [vmem:[#allocation8 + $0x20] sm:$0xff]
    %v879 = vld [vmem:[#allocation8 + $0x28] sm:$0xff]
    %v880 = vld [vmem:[#allocation8 + $0x30] sm:$0xff]
    %v881 = vld [vmem:[#allocation8 + $0x38] sm:$0xff]
    %v882 = vld [vmem:[#allocation8 + $0x40] sm:$0xff]
    %v883 = vld [vmem:[#allocation8 + $0x48] sm:$0xff]
    %v884 = vld [vmem:[#allocation8 + $0x50] sm:$0xff]
    %v885 = vld [vmem:[#allocation8 + $0x58] sm:$0xff]
    %v886 = vld [vmem:[#allocation8 + $0x60] sm:$0xff]
    %v887 = vld [vmem:[#allocation8 + $0x68] sm:$0xff]
    %v888 = vld [vmem:[#allocation8 + $0x70] sm:$0xff]
    %v889 = vld [vmem:[#allocation8 + $0x78] sm:$0xff]
    %v890 = vld [vmem:[#allocation8 + $0x80] sm:$0xff]
    %v891 = vld [vmem:[#allocation8 + $0x88] sm:$0xff]
    %v892 = vld [vmem:[#allocation8 + $0x90] sm:$0xff]
    %v893 = vld [vmem:[#allocation8 + $0x98] sm:$0xff]
    %v894 = vld [vmem:[#allocation8 + $0xa0] sm:$0xff]
    %v895 = vld [vmem:[#allocation8 + $0xa8] sm:$0xff]
    %v896 = vld [vmem:[#allocation8 + $0xb0] sm:$0xff]
    %v897 = vld [vmem:[#allocation8 + $0xb8] sm:$0xff]
    %v898 = vld [vmem:[#allocation8 + $0xc0] sm:$0xff]
    %v899 = vld [vmem:[#allocation8 + $0xc8] sm:$0xff]
    %v900 = vld [vmem:[#allocation8 + $0xd0] sm:$0xff]
    %v901 = vld [vmem:[#allocation8 + $0xd8] sm:$0xff]
    %v902 = vld [vmem:[#allocation8 + $0xe0] sm:$0xff]
    %v903 = vld [vmem:[#allocation8 + $0xe8] sm:$0xff]
    %v904 = vld [vmem:[#allocation8 + $0xf0] sm:$0xff]
    %v905 = vld [vmem:[#allocation8 + $0xf8] sm:$0xff]
    %v906 = vld [vmem:[#allocation8 + $0x100] sm:$0xff]
    %v907 = vld [vmem:[#allocation8 + $0x108] sm:$0xff]
    %v908 = vld [vmem:[#allocation8 + $0x110] sm:$0xff]
    %v909 = vld [vmem:[#allocation8 + $0x118] sm:$0xff]
    %v910 = vld [vmem:[#allocation8 + $0x120] sm:$0xff]
    %v911 = vld [vmem:[#allocation8 + $0x128] sm:$0xff]
    %v912 = vld [vmem:[#allocation8 + $0x130] sm:$0xff]
    %v913 = vld [vmem:[#allocation8 + $0x138] sm:$0xff]
    %v914 = vld [vmem:[#allocation8 + $0x140] sm:$0xff]
    %v915 = vld [vmem:[#allocation8 + $0x148] sm:$0xff]
    %v916 = vld [vmem:[#allocation8 + $0x150] sm:$0xff]
    %v917 = vld [vmem:[#allocation8 + $0x158] sm:$0xff]
    %v918 = vld [vmem:[#allocation8 + $0x160] sm:$0xff]
    %v919 = vld [vmem:[#allocation8 + $0x168] sm:$0xff]
    %v920 = vld [vmem:[#allocation8 + $0x170] sm:$0xff]
    %v921 = vld [vmem:[#allocation8 + $0x178] sm:$0xff]
    %v922 = vld [vmem:[#allocation8 + $0x180] sm:$0xff]
    %v923 = vld [vmem:[#allocation8 + $0x188] sm:$0xff]
    %v924 = vld [vmem:[#allocation8 + $0x190] sm:$0xff]
    %v925 = vld [vmem:[#allocation8 + $0x198] sm:$0xff]
    %v926 = vld [vmem:[#allocation8 + $0x1a0] sm:$0xff]
    %v927 = vld [vmem:[#allocation8 + $0x1a8] sm:$0xff]
    %v928 = vld [vmem:[#allocation8 + $0x1b0] sm:$0xff]
    %v929 = vld [vmem:[#allocation8 + $0x1b8] sm:$0xff]
    %v930 = vld [vmem:[#allocation8 + $0x1c0] sm:$0xff]
    %v931 = vld [vmem:[#allocation8 + $0x1c8] sm:$0xff]
    %v932 = vld [vmem:[#allocation8 + $0x1d0] sm:$0xff]
    %v933 = vld [vmem:[#allocation8 + $0x1d8] sm:$0xff]
    %v934 = vld [vmem:[#allocation8 + $0x1e0] sm:$0xff]
    %v935 = vld [vmem:[#allocation8 + $0x1e8] sm:$0xff]
    %v936 = vld [vmem:[#allocation8 + $0x1f0] sm:$0xff]
    %v937 = vld [vmem:[#allocation8 + $0x1f8] sm:$0xff]
    %v938 = vld [vmem:[%s6] sm:$0xf]
    %v940 = vlaneseq
    %v941 = vshrl.u32 %v940, 7
    %v942 = vsub.s32 0, %v941
    %v943 = vrot.slane %v938, %v942
    %v944 = vlaneseq
    %v945 = vshrl.u32 %v944, 7
    %v946 = vsub.s32 1, %v945
    %v947 = vrot.slane %v938, %v946
    %v948 = vlaneseq
    %v949 = vshrl.u32 %v948, 7
    %v950 = vsub.s32 2, %v949
    %v951 = vrot.slane %v938, %v950
    %v952 = vlaneseq
    %v953 = vshrl.u32 %v952, 7
    %v954 = vsub.s32 3, %v953
    %v955 = vrot.slane %v938, %v954
    %960 = vmatprep.subr.mxu0 %v875
    %961 = vmatpush1.msra.mxu0 %v874
    %962 = vmatprep.subr.mxu0 %v879
    %963 = vmatpush1.msra.mxu0 %v878
    %964 = vmatprep.subr.mxu0 %v883
    %965 = vmatpush1.msra.mxu0 %v882
    %966 = vmatprep.subr.mxu0 %v887
    %967 = vmatpush1.msra.mxu0 %v886
    %968 = vmatprep.subr.mxu0 %v891
    %969 = vmatpush1.msra.mxu0 %v890
    %970 = vmatprep.subr.mxu0 %v895
    %971 = vmatpush1.msra.mxu0 %v894
    %972 = vmatprep.subr.mxu0 %v899
    %973 = vmatpush1.msra.mxu0 %v898
    %974 = vmatprep.subr.mxu0 %v903
    %975 = vmatpush1.msra.mxu0 %v902
    %976 = vmatprep.subr.mxu0 %v907
    %977 = vmatpush1.msra.mxu0 %v906
    %978 = vmatprep.subr.mxu0 %v911
    %979 = vmatpush1.msra.mxu0 %v910
    %980 = vmatprep.subr.mxu0 %v915
    %981 = vmatpush1.msra.mxu0 %v914
    %982 = vmatprep.subr.mxu0 %v919
    %983 = vmatpush1.msra.mxu0 %v918
    %984 = vmatprep.subr.mxu0 %v923
    %985 = vmatpush1.msra.mxu0 %v922
    %986 = vmatprep.subr.mxu0 %v927
    %987 = vmatpush1.msra.mxu0 %v926
    %988 = vmatprep.subr.mxu0 %v931
    %989 = vmatpush1.msra.mxu0 %v930
    %990 = vmatprep.subr.mxu0 %v935
    %991 = vmatpush1.msra.mxu0 %v934
    %992 = vmatprep.subr.mxu0 0.0
    %993 = vmatpush1.msra.mxu0 0.0
    %994 = vmatprep.subr.mxu0 0.0
    %995 = vmatpush1.msra.mxu0 0.0
    %996 = vmatprep.subr.mxu0 0.0
    %997 = vmatpush1.msra.mxu0 0.0
    %998 = vmatprep.subr.mxu0 0.0
    %999 = vmatpush1.msra.mxu0 0.0
    %1000 = vmatprep.subr.mxu0 0.0
    %1001 = vmatpush1.msra.mxu0 0.0
    %1002 = vmatprep.subr.mxu0 0.0
    %1003 = vmatpush1.msra.mxu0 0.0
    %1004 = vmatprep.subr.mxu0 0.0
    %1005 = vmatpush1.msra.mxu0 0.0
    %1006 = vmatprep.subr.mxu0 0.0
    %1007 = vmatpush1.msra.mxu0 0.0
    %1008 = vmatprep.subr.mxu0 0.0
    %1009 = vmatpush1.msra.mxu0 0.0
    %1010 = vmatprep.subr.mxu0 0.0
    %1011 = vmatpush1.msra.mxu0 0.0
    %1012 = vmatprep.subr.mxu0 0.0
    %1013 = vmatpush1.msra.mxu0 0.0
    %1014 = vmatprep.subr.mxu0 0.0
    %1015 = vmatpush1.msra.mxu0 0.0
    %1016 = vmatprep.subr.mxu0 0.0
    %1017 = vmatpush1.msra.mxu0 0.0
    %1018 = vmatprep.subr.mxu0 0.0
    %1019 = vmatpush1.msra.mxu0 0.0
    %1020 = vmatprep.subr.mxu0 0.0
    %1021 = vmatpush1.msra.mxu0 0.0
    %1022 = vmatprep.subr.mxu0 0.0
    %1023 = vmatpush1.msra.mxu0 0.0
    %1024 = vmatprep.mubr.f32.mxu0 0.0
    %1025 = vmatmul.mubr.f32.gmra.mrb[0].mxu0 %v870
    %v1026 = vpop.f32.mrb[0].mxu0
    %v1027 = vadd.f32 %v943, %v1026
    %v1028 = vpop.f32.mrb[0].mxu0
    %v1029 = vadd.f32 %v947, %v1028
    %1030 = vmatprep.mubr.f32.mxu0 0.0
    %1031 = vmatmul.mubr.f32.gmra.mrb[0].mxu0 %v871
    %v1032 = vpop.f32.mrb[0].mxu0
    %v1033 = vadd.f32 %v943, %v1032
    %v1034 = vpop.f32.mrb[0].mxu0
    %v1035 = vadd.f32 %v947, %v1034
    %1036 = vmatprep.mubr.f32.mxu0 0.0
    %1037 = vmatmul.mubr.f32.gmra.mrb[0].mxu0 %v872
    %v1038 = vpop.f32.mrb[0].mxu0
    %v1039 = vadd.f32 %v943, %v1038
    %v1040 = vpop.f32.mrb[0].mxu0
    %v1041 = vadd.f32 %v947, %v1040
    %1042 = vmatprep.mubr.f32.mxu0 0.0
    %1043 = vmatmul.mubr.f32.gmra.mrb[0].mxu0 %v873
    %v1044 = vpop.f32.mrb[0].mxu0
    %v1045 = vadd.f32 %v943, %v1044
    %v1046 = vpop.f32.mrb[0].mxu0
    %v1047 = vadd.f32 %v947, %v1046
    %1048 = vdwg.mxu0
    %1049 = vmatprep.subr.mxu0 %v877
    %1050 = vmatpush1.msra.mxu0 %v876
    %1051 = vmatprep.subr.mxu0 %v881
    %1052 = vmatpush1.msra.mxu0 %v880
    %1053 = vmatprep.subr.mxu0 %v885
    %1054 = vmatpush1.msra.mxu0 %v884
    %1055 = vmatprep.subr.mxu0 %v889
    %1056 = vmatpush1.msra.mxu0 %v888
    %1057 = vmatprep.subr.mxu0 %v893
    %1058 = vmatpush1.msra.mxu0 %v892
    %1059 = vmatprep.subr.mxu0 %v897
    %1060 = vmatpush1.msra.mxu0 %v896
    %1061 = vmatprep.subr.mxu0 %v901
    %1062 = vmatpush1.msra.mxu0 %v900
    %1063 = vmatprep.subr.mxu0 %v905
    %1064 = vmatpush1.msra.mxu0 %v904
    %1065 = vmatprep.subr.mxu0 %v909
    %1066 = vmatpush1.msra.mxu0 %v908
    %1067 = vmatprep.subr.mxu0 %v913
    %1068 = vmatpush1.msra.mxu0 %v912
    %1069 = vmatprep.subr.mxu0 %v917
    %1070 = vmatpush1.msra.mxu0 %v916
    %1071 = vmatprep.subr.mxu0 %v921
    %1072 = vmatpush1.msra.mxu0 %v920
    %1073 = vmatprep.subr.mxu0 %v925
    %1074 = vmatpush1.msra.mxu0 %v924
    %1075 = vmatprep.subr.mxu0 %v929
    %1076 = vmatpush1.msra.mxu0 %v928
    %1077 = vmatprep.subr.mxu0 %v933
    %1078 = vmatpush1.msra.mxu0 %v932
    %1079 = vmatprep.subr.mxu0 %v937
    %1080 = vmatpush1.msra.mxu0 %v936
    %1081 = vmatprep.subr.mxu0 0.0
    %1082 = vmatpush1.msra.mxu0 0.0
    %1083 = vmatprep.subr.mxu0 0.0
    %1084 = vmatpush1.msra.mxu0 0.0
    %1085 = vmatprep.subr.mxu0 0.0
    %1086 = vmatpush1.msra.mxu0 0.0
    %1087 = vmatprep.subr.mxu0 0.0
    %1088 = vmatpush1.msra.mxu0 0.0
    %1089 = vmatprep.subr.mxu0 0.0
    %1090 = vmatpush1.msra.mxu0 0.0
    %1091 = vmatprep.subr.mxu0 0.0
    %1092 = vmatpush1.msra.mxu0 0.0
    %1093 = vmatprep.subr.mxu0 0.0
    %1094 = vmatpush1.msra.mxu0 0.0
    %1095 = vmatprep.subr.mxu0 0.0
    %1096 = vmatpush1.msra.mxu0 0.0
    %1097 = vmatprep.subr.mxu0 0.0
    %1098 = vmatpush1.msra.mxu0 0.0
    %1099 = vmatprep.subr.mxu0 0.0
    %1100 = vmatpush1.msra.mxu0 0.0
    %1101 = vmatprep.subr.mxu0 0.0
    %1102 = vmatpush1.msra.mxu0 0.0
    %1103 = vmatprep.subr.mxu0 0.0
    %1104 = vmatpush1.msra.mxu0 0.0
    %1105 = vmatprep.subr.mxu0 0.0
    %1106 = vmatpush1.msra.mxu0 0.0
    %1107 = vmatprep.subr.mxu0 0.0
    %1108 = vmatpush1.msra.mxu0 0.0
    %1109 = vmatprep.subr.mxu0 0.0
    %1110 = vmatpush1.msra.mxu0 0.0
    %1111 = vmatprep.subr.mxu0 0.0
    %1112 = vmatpush1.msra.mxu0 0.0
    %1113 = vmatprep.mubr.f32.mxu0 0.0
    %1114 = vmatmul.mubr.f32.gmra.mrb[0].mxu0 %v870
    %v1115 = vpop.f32.mrb[0].mxu0
    %v1116 = vadd.f32 %v951, %v1115
    %v1117 = vpop.f32.mrb[0].mxu0
    %v1118 = vadd.f32 %v955, %v1117
    %1119 = vmatprep.mubr.f32.mxu0 0.0
    %1120 = vmatmul.mubr.f32.gmra.mrb[0].mxu0 %v871
    %v1121 = vpop.f32.mrb[0].mxu0
    %v1122 = vadd.f32 %v951, %v1121
    %v1123 = vpop.f32.mrb[0].mxu0
    %v1124 = vadd.f32 %v955, %v1123
    %1125 = vmatprep.mubr.f32.mxu0 0.0
    %1126 = vmatmul.mubr.f32.gmra.mrb[0].mxu0 %v872
    %v1127 = vpop.f32.mrb[0].mxu0
    %v1128 = vadd.f32 %v951, %v1127
    %v1129 = vpop.f32.mrb[0].mxu0
    %v1130 = vadd.f32 %v955, %v1129
    %1131 = vmatprep.mubr.f32.mxu0 0.0
    %1132 = vmatmul.mubr.f32.gmra.mrb[0].mxu0 %v873
    %v1133 = vpop.f32.mrb[0].mxu0
    %v1134 = vadd.f32 %v951, %v1133
    %v1135 = vpop.f32.mrb[0].mxu0
    %v1136 = vadd.f32 %v955, %v1135
    %1137 = vdwg.mxu0
    %v1138 = vadd.f32 %v1027, %v82
    %v1139 = vadd.f32 %v1029, %v83
    %v1140 = vadd.f32 %v1116, %v84
    %v1141 = vadd.f32 %v1118, %v85
    %v1142 = vadd.f32 %v1033, %v86
    %v1143 = vadd.f32 %v1035, %v87
    %v1144 = vadd.f32 %v1122, %v88
    %v1145 = vadd.f32 %v1124, %v89
    %v1146 = vadd.f32 %v1039, %v90
    %v1147 = vadd.f32 %v1041, %v91
    %v1148 = vadd.f32 %v1128, %v92
    %v1149 = vadd.f32 %v1130, %v93
    %v1150 = vadd.f32 %v1045, %v94
    %v1151 = vadd.f32 %v1047, %v95
    %v1152 = vadd.f32 %v1134, %v96
    %v1153 = vadd.f32 %v1136, %v97
    %v1154 = vmax.f32 %v1138, 0.0
    %v1155 = vmax.f32 %v1139, 0.0
    %v1156 = vmax.f32 %v1140, 0.0
    %v1157 = vmax.f32 %v1141, 0.0
    %v1158 = vmax.f32 %v1142, 0.0
    %v1159 = vmax.f32 %v1143, 0.0
    %v1160 = vmax.f32 %v1144, 0.0
    %v1161 = vmax.f32 %v1145, 0.0
    %v1162 = vmax.f32 %v1146, 0.0
    %v1163 = vmax.f32 %v1147, 0.0
    %v1164 = vmax.f32 %v1148, 0.0
    %v1165 = vmax.f32 %v1149, 0.0
    %v1166 = vmax.f32 %v1150, 0.0
    %v1167 = vmax.f32 %v1151, 0.0
    %v1168 = vmax.f32 %v1152, 0.0
    %v1169 = vmax.f32 %v1153, 0.0
    %1170 = vst [vmem:[#allocation10] sm:$0xff] %v1154
    %1171 = vst [vmem:[#allocation10 + $0x8] sm:$0xff] %v1155
    %1172 = vst [vmem:[#allocation10 + $0x10] sm:$0xff] %v1156
    %1173 = vst [vmem:[#allocation10 + $0x18] sm:$0xff] %v1157
    %1174 = vst [vmem:[#allocation10 + $0x20] sm:$0xff] %v1158
    %1175 = vst [vmem:[#allocation10 + $0x28] sm:$0xff] %v1159
    %1176 = vst [vmem:[#allocation10 + $0x30] sm:$0xff] %v1160
    %1177 = vst [vmem:[#allocation10 + $0x38] sm:$0xff] %v1161
    %1178 = vst [vmem:[#allocation10 + $0x40] sm:$0xff] %v1162
    %1179 = vst [vmem:[#allocation10 + $0x48] sm:$0xff] %v1163
    %1180 = vst [vmem:[#allocation10 + $0x50] sm:$0xff] %v1164
    %1181 = vst [vmem:[#allocation10 + $0x58] sm:$0xff] %v1165
    %1182 = vst [vmem:[#allocation10 + $0x60] sm:$0xff] %v1166
    %1183 = vst [vmem:[#allocation10 + $0x68] sm:$0xff] %v1167
    %1184 = vst [vmem:[#allocation10 + $0x70] sm:$0xff] %v1168
    %1185 = vst [vmem:[#allocation10 + $0x78] sm:$0xff] %v1169
    // Predicated region
    $region46: #{tpu_custom_call.1} parent=1 // pred_check
      _
    $region47: #{tpu_custom_call.1} parent=1 // pred_check_branch
      %1187 = sbr.rel (0) target = $region49
    $region48: #{tpu_custom_call.1} parent=1 // pred_region
      %s1189 = ssub.s32 2048, 2048
      %1190 = vsyncadd [#allocation4], %s1189
      %s1191 = sshll.u32 [#allocation10], 4
      %s1192 = int_to_ptr.vmem [resolvable:$true] %s1191
      %1197 = dma.vmem_to_hbm [thread:$0]  %s1192, 2048, %s7, [#allocation4], 512, 512, 32
    $region49: #{tpu_custom_call.1} parent=1 // pred_fallthru
      _
    // Predicated region
    $region50: #{tpu_custom_call.1} parent=1 // pred_check
      _
    $region51: #{tpu_custom_call.1} parent=1 // pred_check_branch
      %1199 = sbr.rel (0) target = $region53
    $region52: #{tpu_custom_call.1} parent=1 // pred_region
      %1200 = dma.done [#allocation4], 2048
    $region53: #{tpu_custom_call.1} parent=1 // pred_fallthru
      _
    %1201 = vsyncpa [#allocation3], 1
    %1202 = vsyncpa [#allocation6], 1
    %1203 = vsyncpa [#allocation9], 1
    %1204 = vsyncpa [#allocation4], 1

</llo_original>
